<compile_context>
chip_gen: v6e
topology: v6e:2x2x1
jax: 0.10.0
libtpu: 0.0.40
codegen_flags: <defaults>
</compile_context>

<pallas_src>
import functools

import jax
import jax.numpy as jnp
from jax import lax
from jax.experimental import pallas as pl
from jax.experimental.pallas import tpu as pltpu


# --------------------------------------------------------------------------
# Stage 1: streaming mean-pool (seq-sum) kernel.
# Grid = (batch tiles [parallel], seq chunks [arbitrary, innermost]).
# The f32 output block is the accumulator (resident across the seq axis).
# --------------------------------------------------------------------------
def _pool_kernel(x_ref, out_ref, *, seq_len, ts):
    # x_ref: [tb, ts, H]   out_ref: [tb, H] f32 (seq-sum accumulator)
    s = pl.program_id(1)

    @pl.when(s == 0)
    def _():
        out_ref[...] = jnp.zeros_like(out_ref)

    chunk = x_ref[...].astype(jnp.float32)
    if seq_len % ts != 0:
        # Ragged tail: positions past seq_len are out-of-bounds garbage reads;
        # zero them so they do not pollute the sum.
        valid = jnp.minimum(ts, seq_len - s * ts)
        idx = lax.broadcasted_iota(jnp.int32, chunk.shape, 1)
        chunk = jnp.where(idx < valid, chunk, 0.0)

    out_ref[...] += jnp.sum(chunk, axis=1)


def _pool(x, *, tb, ts):
    B, S, H = x.shape
    grid = (pl.cdiv(B, tb), pl.cdiv(S, ts))
    cost = pl.CostEstimate(
        flops=int(B * S * H),
        transcendentals=0,
        bytes_accessed=int(x.size * x.dtype.itemsize + B * H * 4),
    )
    return pl.pallas_call(
        functools.partial(_pool_kernel, seq_len=S, ts=ts),
        out_shape=jax.ShapeDtypeStruct((B, H), jnp.float32),
        grid_spec=pltpu.PrefetchScalarGridSpec(
            num_scalar_prefetch=0,
            grid=grid,
            in_specs=[pl.BlockSpec((tb, ts, H), lambda i, s: (i, s, 0))],
            out_specs=pl.BlockSpec((tb, H), lambda i, s: (i, 0)),
        ),
        compiler_params=pltpu.CompilerParams(
            dimension_semantics=("parallel", "arbitrary")),
        cost_estimate=cost,
    )(x)


# --------------------------------------------------------------------------
# Stage 2: projection + tanh -> bf16 embeddings.  Grid = (batch tiles,).
# --------------------------------------------------------------------------
def _project_kernel(p_ref, w_ref, b_ref, emb_ref):
    # p_ref: [tb, H] f32   w_ref: [H, D] f32   b_ref: [1, D]   emb_ref: [tb, D] bf16
    z = jnp.dot(p_ref[...], w_ref[...],
                preferred_element_type=jnp.float32) + b_ref[...]
    emb_ref[...] = jnp.tanh(z).astype(emb_ref.dtype)


def _project(pooled, w, b, *, tb):
    B, H = pooled.shape
    D = w.shape[1]
    cost = pl.CostEstimate(
        flops=int(2 * B * H * D + B * D),
        transcendentals=int(B * D),
        bytes_accessed=int(B * H * 4 + H * D * 4 + D * 4 + B * D * 2),
    )
    return pl.pallas_call(
        _project_kernel,
        out_shape=jax.ShapeDtypeStruct((B, D), jnp.bfloat16),
        grid_spec=pltpu.PrefetchScalarGridSpec(
            num_scalar_prefetch=0,
            grid=(pl.cdiv(B, tb),),
            in_specs=[
                pl.BlockSpec((tb, H), lambda i: (i, 0)),
                pl.BlockSpec((H, D), lambda i: (0, 0)),
                pl.BlockSpec((1, D), lambda i: (0, 0)),
            ],
            out_specs=pl.BlockSpec((tb, D), lambda i: (i, 0)),
        ),
        compiler_params=pltpu.CompilerParams(
            dimension_semantics=("parallel",)),
        cost_estimate=cost,
    )(pooled, w, b)


def _batch_tile(n):
    # Full dim for small batches (always a legal block dim); 256 otherwise
    # (multiple of 8 and 128, MXU-friendly on v6e/v7x, fine on v5e).
    return n if n <= 256 else 256


def _encode(x, w, b):
    """x: [B, S, H] -> bf16 embeddings [B, D]."""
    B, S, H = x.shape
    # Fold the mean-pool 1/S into the projection weights (zero in-kernel cost).
    w_eff = (w.astype(jnp.float32) / jnp.float32(S))
    b = b.astype(jnp.float32)

    tb = _batch_tile(B)
    ts = S if S <= 512 else 512        # full dim or a multiple of 8
    pooled = _pool(x, tb=tb, ts=ts)            # [B, H] f32 (seq-sum)
    return _project(pooled, w_eff, b, tb=tb)   # [B, D] bf16


# --------------------------------------------------------------------------
# Stage 3: similarity matmul q_emb @ d_emb.T.
# Full embedding dim per tile (no k axis); d_emb pre-transposed on the host so
# the kernel is a plain (1,0)-contraction on the MXU.  j innermost -> q tile
# stays resident across the j sweep.
# --------------------------------------------------------------------------
def _scores_kernel(q_ref, dt_ref, o_ref):
    # q_ref: [tm, D] bf16   dt_ref: [D, tn] bf16   o_ref: [tm, tn] f32
    o_ref[...] = jnp.dot(q_ref[...], dt_ref[...],
                         preferred_element_type=jnp.float32)


def _scores(q_emb, d_emb_t):
    Bq, D = q_emb.shape
    _, Bd = d_emb_t.shape
    tm = _batch_tile(Bq)
    tn = _batch_tile(Bd)
    grid = (pl.cdiv(Bq, tm), pl.cdiv(Bd, tn))
    cost = pl.CostEstimate(
        flops=int(2 * Bq * Bd * D),
        transcendentals=0,
        bytes_accessed=int(Bq * D * 2 + Bd * D * 2 + Bq * Bd * 4),
    )
    return pl.pallas_call(
        _scores_kernel,
        out_shape=jax.ShapeDtypeStruct((Bq, Bd), jnp.float32),
        grid_spec=pltpu.PrefetchScalarGridSpec(
            num_scalar_prefetch=0,
            grid=grid,
            in_specs=[
                pl.BlockSpec((tm, D), lambda i, j: (i, 0)),
                pl.BlockSpec((D, tn), lambda i, j: (0, j)),
            ],
            out_specs=pl.BlockSpec((tm, tn), lambda i, j: (i, j)),
        ),
        compiler_params=pltpu.CompilerParams(
            dimension_semantics=("parallel", "parallel")),
        cost_estimate=cost,
    )(q_emb, d_emb_t)


# --------------------------------------------------------------------------
# Model wrapper.
# --------------------------------------------------------------------------
def dpr_model_pallas(input_q, input_doc, params):
    """The synthetic `model((input_q, input_doc))` as Pallas kernels."""
    wq, bq, wd, bd = params
    q_emb = _encode(input_q, wq, bq)       # [Bq, D] bf16
    d_emb = _encode(input_doc, wd, bd)     # [Bd, D] bf16
    d_emb_t = d_emb.T                      # one-time host transpose of a tiny matrix
    return _scores(q_emb, d_emb_t)         # [Bq, Bd] f32


def wrapper_dpr_forward(input_doc, input_q, params):
    """Mirrors WrapperDpr.forward(input_doc, input_q) -> model((input_q, input_doc))."""
    return dpr_model_pallas(input_q, input_doc, params)


def reference_forward(input_doc, input_q, params):
    """Pure-JAX f32 reference for correctness checking."""
    wq, bq, wd, bd = params
    q_emb = jnp.tanh(jnp.mean(input_q.astype(jnp.float32), axis=1) @ wq + bq)
    d_emb = jnp.tanh(jnp.mean(input_doc.astype(jnp.float32), axis=1) @ wd + bd)
    return q_emb @ d_emb.T


if __name__ == "__main__":
    # Small shapes: batch=2, seq=8, hidden=32, embed=32.
    Bq, Bd, S, H, D = 2, 2, 8, 32, 32

    key = jax.random.PRNGKey(0)
    k_q, k_d, k_wq, k_bq, k_wd, k_bd = jax.random.split(key, 6)

    input_q = jax.random.normal(k_q, (Bq, S, H), dtype=jnp.float32)
    input_doc = jax.random.normal(k_d, (Bd, S, H), dtype=jnp.float32)

    # Deterministic synthetic bi-encoder weights.
    wq = jax.random.normal(k_wq, (H, D), dtype=jnp.float32) * 0.05
    bq = jax.random.normal(k_bq, (1, D), dtype=jnp.float32) * 0.01
    wd = jax.random.normal(k_wd, (H, D), dtype=jnp.float32) * 0.05
    bd = jax.random.normal(k_bd, (1, D), dtype=jnp.float32) * 0.01
    params = (wq, bq, wd, bd)

    scores = wrapper_dpr_forward(input_doc, input_q, params)
    scores = jax.block_until_ready(scores)

    ref = reference_forward(input_doc, input_q, params)
    assert scores.shape == (Bq, Bd)
    # Embeddings are stored in bf16 (per perf review) -> loosened tolerance
    # vs. the pure-f32 reference; accumulation inside the kernels is f32.
    assert jnp.allclose(scores, ref, atol=5e-3, rtol=1e-2), (scores, ref)

    print("KERNEL_OK")
</pallas_src>

<mosaic_0001>
module attributes {stable_mosaic.version = 11 : i64} {
  func.func @_pool_kernel(%arg0: i32, %arg1: i32, %arg2: memref<2x8x32xf32, #tpu.memory_space<vmem>>, %arg3: memref<2x32xf32, #tpu.memory_space<vmem>>) attributes {dimension_semantics = [#tpu.dimension_semantics<parallel>, #tpu.dimension_semantics<arbitrary>], iteration_bounds = array<i64: 1, 1>, scalar_prefetch = 0 : i64, scratch_operands = 0 : i64, tpu.core_type = #tpu.core_type<tc>, window_params = [{transform_indices = @transform_0, window_bounds = array<i64: 2, 8, 32>}, {transform_indices = @transform_1, window_bounds = array<i64: 2, 32>}]} {
    %c0_i32 = arith.constant 0 : i32
    %0 = arith.cmpi eq, %arg1, %c0_i32 : i32
    %1 = arith.extui %0 : i1 to i32
    %c0_i32_0 = arith.constant 0 : i32
    %2 = arith.cmpi ne, %1, %c0_i32_0 : i32
    scf.if %2 {
      %cst_7 = arith.constant 0.000000e+00 : f32
      %8 = vector.broadcast %cst_7 : f32 to vector<2x32xf32>
      %c0_8 = arith.constant 0 : index
      %c0_9 = arith.constant 0 : index
      %9 = vector.load %arg3[%c0_8, %c0_9] : memref<2x32xf32, #tpu.memory_space<vmem>>, vector<2x32xf32>
      tpu.vector_store %arg3[%c0_8, %c0_9], %8 {strides = array<i32>} : memref<2x32xf32, #tpu.memory_space<vmem>>, vector<2x32xf32>,
    } else {
    }
    %c0 = arith.constant 0 : index
    %c0_1 = arith.constant 0 : index
    %c0_2 = arith.constant 0 : index
    %3 = vector.load %arg2[%c0, %c0_1, %c0_2] : memref<2x8x32xf32, #tpu.memory_space<vmem>>, vector<2x8x32xf32>
    %c0_3 = arith.constant 0 : index
    %c0_4 = arith.constant 0 : index
    %4 = vector.load %arg3[%c0_3, %c0_4] : memref<2x32xf32, #tpu.memory_space<vmem>>, vector<2x32xf32>
    %cst = arith.constant dense<0.000000e+00> : vector<2x32xf32>
    %5 = vector.multi_reduction <add>, %3, %cst [1] : vector<2x8x32xf32> to vector<2x32xf32>
    %6 = arith.addf %4, %5 : vector<2x32xf32>
    %c0_5 = arith.constant 0 : index
    %c0_6 = arith.constant 0 : index
    %7 = vector.load %arg3[%c0_5, %c0_6] : memref<2x32xf32, #tpu.memory_space<vmem>>, vector<2x32xf32>
    tpu.vector_store %arg3[%c0_5, %c0_6], %6 {strides = array<i32>} : memref<2x32xf32, #tpu.memory_space<vmem>>, vector<2x32xf32>,
    return
  }
  func.func @transform_0(%arg0: i32, %arg1: i32) -> (i32, i32, i32) {
    %c0_i32 = arith.constant 0 : i32
    %c0_i32_0 = arith.constant 0 : i32
    return %arg0, %arg1, %c0_i32 : i32, i32, i32
  }
  func.func @transform_1(%arg0: i32, %arg1: i32) -> (i32, i32) {
    %c0_i32 = arith.constant 0 : i32
    %c0_i32_0 = arith.constant 0 : i32
    return %arg0, %c0_i32 : i32, i32
  }
}

</mosaic_0001>

<llo_original>
// kernel: tpu_custom_call.1
$region0: #{tpu_custom_call.1}
  #allocation0 [shape = 'u32[]', space=smem, size = 0x4, offset = 0x4, fixed_abs, tag = 'smem constant byte address 0x4 - core index']
  #allocation1 [shape = 'u32[144,128]{1,0:T(1,128)}', space=vmem, size = 0x12000, scoped, tag = 'internal scratch']
  %s0 = inlined_call_operand.hbm [shape: f32[2,8,32], index: 0, kind: input, shape index: {}]
  %s1 = inlined_call_operand.hbm [shape: f32[2,32], index: 1, kind: output, shape index: {}]
  %s2 = sld [smem:[#allocation0]]
  $region22: #{tpu_custom_call.1} parent=0
    _
  %s4 = ssub.s32 1, %s2
  %s5 = scalar_select 0, %s4, %s2
  $region1: #{tpu_custom_call.1} parent=0
    #allocation2 [shape = 'u8[8192]{0}', space=vmem, size = 0x2000, scoped, tag = 'input window, operand 0, single buffered']
    #allocation3 [shape = 's32[1]{0}', space=sflag, size = 0x4, scoped, tag = 'scoped memory for tpu_custom_call.1']
    #allocation4 [shape = 's32[1]{0}', space=sflag, size = 0x4, scoped, tag = 'scoped memory for tpu_custom_call.1']
    #allocation5 [shape = 'u8[1024]{0}', space=vmem, size = 0x400, scoped, tag = 'output window, operand 0, single buffered']
    %6 = vsyncpa [#allocation3], 0
    %7 = vsyncpa [#allocation4], 0
    // Predicated region
    $region2: #{tpu_custom_call.1} parent=1 // pred_check
      _
    $region3: #{tpu_custom_call.1} parent=1 // pred_check_branch
      %9 = sbr.rel (0) target = $region5
    $region4: #{tpu_custom_call.1} parent=1 // pred_region
      %s11 = ssub.s32 256, 256
      %12 = vsyncadd [#allocation3], %s11
      %s13 = sshll.u32 [#allocation2], 4
      %s14 = int_to_ptr.vmem [resolvable:$true] %s13
      %19 = dma.hbm_to_vmem [thread:$0]  %s0, 256, %s14, [#allocation3], 128, 128, 8
    $region5: #{tpu_custom_call.1} parent=1 // pred_fallthru
      _
    // Predicated region
    $region6: #{tpu_custom_call.1} parent=1 // pred_check
      _
    $region7: #{tpu_custom_call.1} parent=1 // pred_check_branch
      %21 = sbr.rel (0) target = $region9
    $region8: #{tpu_custom_call.1} parent=1 // pred_region
      %22 = dma.done [#allocation3], 256
    $region9: #{tpu_custom_call.1} parent=1 // pred_fallthru
      _
    %p23 = scmp.eq.s32.totalorder 0, 0
    // Predicated region
    $region10: #{tpu_custom_call.1} parent=1 // pred_check
      %p24 = pneg %p23
    $region11: #{tpu_custom_call.1} parent=1 // pred_check_branch
      %26 = sbr.rel (%p24) target = $region13
    $region12: #{tpu_custom_call.1} parent=1 // pred_region
      %vm27 = vcmask 254976
      %28 = vst.msk [vmem:[#allocation5] sm:$0x3] %vm27, 0.0
    $region13: #{tpu_custom_call.1} parent=1 // pred_fallthru
      _
    %v29 = vld [vmem:[#allocation2] sm:$0xff]
    %v30 = vld [vmem:[#allocation2 + $0x8] sm:$0xff]
    %v31 = vld [vmem:[#allocation5] sm:$0x3]
    %vm32 = vcmask 261120
    %v33 = vsel %vm32, %v29, 0.0
    %v34 = vrot.slane %v33, 4
    %v35 = vadd.f32 %v33, %v34
    %v36 = vrot.slane %v35, 2
    %v37 = vadd.f32 %v35, %v36
    %v38 = vrot.slane %v37, 1
    %v39 = vadd.f32 %v37, %v38
    %v40 = vsel %vm32, %v30, 0.0
    %v41 = vrot.slane %v40, 4
    %v42 = vadd.f32 %v40, %v41
    %v43 = vrot.slane %v42, 2
    %v44 = vadd.f32 %v42, %v43
    %v45 = vrot.slane %v44, 1
    %v46 = vadd.f32 %v44, %v45
    %vm49 = vcmask 1041409
    %v50 = vsel %vm49, %v46, %v39
    %v52 = vadd.f32 %v31, %v50
    %vm53 = vcmask 254976
    %54 = vst.msk [vmem:[#allocation5] sm:$0x3] %vm53, %v52
    // Predicated region
    $region14: #{tpu_custom_call.1} parent=1 // pred_check
      _
    $region15: #{tpu_custom_call.1} parent=1 // pred_check_branch
      %56 = sbr.rel (0) target = $region17
    $region16: #{tpu_custom_call.1} parent=1 // pred_region
      %s58 = ssub.s32 32, 32
      %59 = vsyncadd [#allocation4], %s58
      %s61 = sshll.u32 [#allocation5], 4
      %s62 = int_to_ptr.vmem [resolvable:$true] %s61
      %64 = dma.vmem_to_hbm [thread:$0]  %s62, 32, %s1, [#allocation4]
    $region17: #{tpu_custom_call.1} parent=1 // pred_fallthru
      _
    // Predicated region
    $region18: #{tpu_custom_call.1} parent=1 // pred_check
      _
    $region19: #{tpu_custom_call.1} parent=1 // pred_check_branch
      %66 = sbr.rel (0) target = $region21
    $region20: #{tpu_custom_call.1} parent=1 // pred_region
      %67 = dma.done [#allocation4], 32
    $region21: #{tpu_custom_call.1} parent=1 // pred_fallthru
      _
    %68 = vsyncpa [#allocation3], 1
    %69 = vsyncpa [#allocation4], 1

</llo_original>
